<compile_context>
chip_gen: v5e
topology: v5e:2x2
jax: 0.10.0
libtpu: 0.0.40
codegen_flags: <defaults>
</compile_context>

<pallas_src>
import functools

import jax
import jax.numpy as jnp
from jax.experimental import pallas as pl
from jax.experimental.pallas import tpu as pltpu


# ----------------------------- kernels --------------------------------------


def _gemm_bias_kernel(a_ref, w_ref, b_ref, out_ref):
    """out tile = a_tile @ w_tile + b_tile (bf16 inputs, f32 accumulation)."""
    out_ref[...] = (jnp.dot(a_ref[...], w_ref[...],
                            preferred_element_type=jnp.float32)
                    + b_ref[...]).astype(out_ref.dtype)


def _lstm_recurrence_kernel(gx_ref, whh_ref, hseq_ref, h_ref, c_ref, *, hidden):
    """One timestep of the LSTM recurrence (grid axis 1 = time, sequential)."""
    H = hidden

    # zero-init recurrent state at t == 0 (matches torch.zeros(...) in forward)
    @pl.when(pl.program_id(1) == 0)
    def _init():
        h_ref[...] = jnp.zeros_like(h_ref)
        c_ref[...] = jnp.zeros_like(c_ref)

    # gates = (x @ W_ih + b)  [precomputed, streamed in]  +  h @ W_hh
    gates = (jnp.dot(h_ref[...], whh_ref[...],
                     preferred_element_type=jnp.float32)
             + gx_ref[...])

    # 128-aligned gate slices; elementwise/transcendental math kept in f32
    i = jax.nn.sigmoid(gates[:, 0 * H:1 * H])
    f = jax.nn.sigmoid(gates[:, 1 * H:2 * H])
    g = jnp.tanh(gates[:, 2 * H:3 * H])
    o = jax.nn.sigmoid(gates[:, 3 * H:4 * H])

    c_new = f * c_ref[...] + i * g
    h_new = (o * jnp.tanh(c_new)).astype(h_ref.dtype)   # single f32->bf16 cast

    c_ref[...] = c_new
    h_ref[...] = h_new
    hseq_ref[...] = h_new


# ----------------------------- helpers ---------------------------------------


def _round_up(x, m):
    return (x + m - 1) // m * m


def _pad_to(a, shape):
    pads = [(0, s - d) for d, s in zip(a.shape, shape)]
    return jnp.pad(a, pads)


def _pick_tile(dim, cap, align):
    """Largest multiple of `align` that divides `dim` and is <= cap."""
    t = min(dim, cap)
    t -= t % align
    t = max(t, align)
    while dim % t:
        t -= align
    return t


def _gemm_bias(a, w, b, out_dtype=jnp.float32, tm_cap=512, tn_cap=512):
    """Tiled (M,K)@(K,N)+b with N-tiles as the OUTER grid axis so each W tile
    is read from HBM exactly once; both axes parallel (megacore)."""
    M, K = a.shape
    N = w.shape[1]
    TM = _pick_tile(M, tm_cap, 8)
    TN = _pick_tile(N, tn_cap, 128)
    return pl.pallas_call(
        _gemm_bias_kernel,
        out_shape=jax.ShapeDtypeStruct((M, N), out_dtype),
        grid=(N // TN, M // TM),                               # W-tile invariant on inner axis
        in_specs=[
            pl.BlockSpec((TM, K), lambda j, i: (i, 0)),        # A row tile
            pl.BlockSpec((K, TN), lambda j, i: (0, j)),        # W column tile
            pl.BlockSpec((1, TN), lambda j, i: (0, j)),        # bias tile
        ],
        out_specs=pl.BlockSpec((TM, TN), lambda j, i: (i, j)),
        compiler_params=pltpu.CompilerParams(
            dimension_semantics=("parallel", "parallel"),      # megacore shards N
        ),
    )(a, w, b)


# ----------------------------- wrapper ---------------------------------------


def decoder_rnn_forward(features, captions, params):
    """features: (B, E) f32, captions: (B, T) int32 -> (B, T, V) f32."""
    B, E = features.shape
    T = captions.shape[1]
    H = params["W_hh"].shape[0]
    V = params["W_fc"].shape[1]

    Bp = _round_up(B, 8)
    Ep = _round_up(E, 128)
    Hp = _round_up(H, 128)
    Vp = _round_up(V, 128)
    bf16 = jnp.bfloat16

    # Split the batch over both TensorCores for the recurrence when the
    # per-core chunk stays 8-aligned (v7x megacore; harmless elsewhere).
    nb = 2 if (Bp % 16 == 0) else 1
    Bpc = Bp // nb

    # Pad weights (per-gate for the LSTM so [i|f|g|o] stays 128-aligned) and
    # store matmul operands in bf16 (f32 accumulation inside the kernels).
    W_ih_p = _pad_to(params["W_ih"].reshape(E, 4, H), (Ep, 4, Hp)).reshape(Ep, 4 * Hp).astype(bf16)
    W_hh_p = _pad_to(params["W_hh"].reshape(H, 4, H), (Hp, 4, Hp)).reshape(Hp, 4 * Hp).astype(bf16)
    b_p = _pad_to(params["b"].reshape(1, 4, H), (1, 4, Hp)).reshape(1, 4 * Hp)
    W_fc_p = _pad_to(params["W_fc"], (Hp, Vp)).astype(bf16)
    b_fc_p = _pad_to(params["b_fc"], (1, Vp))
    embed_p = _pad_to(params["embed"], (V, Ep)).astype(bf16)

    # Glue: embedding lookup, batch-major (b, t) row order — no transposes.
    # x[b, 0] = features[b], x[b, t>=1] = embed(captions[b, t])  (matches the torch loop)
    x = jnp.take(embed_p, captions, axis=0)                       # (B, T, Ep) bf16
    x = x.at[:, 0, :].set(_pad_to(features, (B, Ep)).astype(bf16))
    x_all = _pad_to(x, (Bp, T, Ep)).reshape(Bp * T, Ep)           # (Bp*T, Ep) bf16

    # --- Kernel A1: hoisted input projection + bias (one large MXU-filling GEMM)
    gates_x = _gemm_bias(x_all, W_ih_p, b_p)                      # (Bp*T, 4Hp) f32
    gates_x = gates_x.reshape(Bp, T * 4 * Hp)                     # free reshape

    # --- Kernel B: sequential recurrence, streamed one timestep per grid step
    h_seq = pl.pallas_call(
        functools.partial(_lstm_recurrence_kernel, hidden=Hp),
        out_shape=jax.ShapeDtypeStruct((Bp, T * Hp), bf16),
        grid=(nb, T),
        in_specs=[
            pl.BlockSpec((Bpc, 4 * Hp), lambda c, t: (c, t)),     # gates_x[t] slice
            pl.BlockSpec((Hp, 4 * Hp), lambda c, t: (0, 0)),      # W_hh (loaded once)
        ],
        out_specs=pl.BlockSpec((Bpc, Hp), lambda c, t: (c, t)),   # h_seq[:, t] slice
        scratch_shapes=[
            pltpu.VMEM((Bpc, Hp), bf16),                          # hidden state (bf16)
            pltpu.VMEM((Bpc, Hp), jnp.float32),                   # cell state (f32)
        ],
        compiler_params=pltpu.CompilerParams(
            dimension_semantics=("parallel", "arbitrary"),        # batch parallel, time sequential
        ),
    )(gates_x, W_hh_p)

    # Rows are already (b, t)-ordered -> free reshape, no transpose.
    h_rows = h_seq.reshape(Bp * T, Hp)                            # (Bp*T, Hp) bf16

    # --- Kernel A2: vocab projection (W_fc read from HBM once; V sharded on megacore)
    logits = _gemm_bias(h_rows, W_fc_p, b_fc_p)                   # (Bp*T, Vp) f32

    # Free reshape to (Bp, T, Vp), then un-pad.
    return logits.reshape(Bp, T, Vp)[:B, :, :V]


# ----------------------------- params / reference ----------------------------


def init_params(key, embed_size, hidden_size, vocab_size):
    """Deterministic synthetic init (shapes follow nn.LSTMCell / nn.Linear / nn.Embedding)."""
    ks = jax.random.split(key, 7)
    k = 1.0 / jnp.sqrt(hidden_size)
    W_ih = jax.random.uniform(ks[0], (embed_size, 4 * hidden_size), jnp.float32, -k, k)
    W_hh = jax.random.uniform(ks[1], (hidden_size, 4 * hidden_size), jnp.float32, -k, k)
    b_ih = jax.random.uniform(ks[2], (4 * hidden_size,), jnp.float32, -k, k)
    b_hh = jax.random.uniform(ks[3], (4 * hidden_size,), jnp.float32, -k, k)
    W_fc = jax.random.uniform(ks[4], (hidden_size, vocab_size), jnp.float32, -k, k)
    b_fc = jax.random.uniform(ks[5], (vocab_size,), jnp.float32, -k, k)
    embed = jax.random.normal(ks[6], (vocab_size, embed_size), jnp.float32)
    return {
        "W_ih": W_ih,                     # (E, 4H)
        "W_hh": W_hh,                     # (H, 4H)
        "b": (b_ih + b_hh)[None, :],      # (1, 4H)
        "W_fc": W_fc,                     # (H, V)
        "b_fc": b_fc[None, :],            # (1, V)
        "embed": embed,                   # (V, E)
    }


def reference_forward(features, captions, params):
    """Pure-JAX reference mirroring the PyTorch loop with the same bf16 matmul inputs."""
    B = features.shape[0]
    T = captions.shape[1]
    H = params["W_hh"].shape[0]
    bf16 = jnp.bfloat16
    W_ih = params["W_ih"].astype(bf16)
    W_hh = params["W_hh"].astype(bf16)
    W_fc = params["W_fc"].astype(bf16)
    embed = params["embed"].astype(bf16)
    b, b_fc = params["b"], params["b_fc"]

    h = jnp.zeros((B, H), jnp.float32)
    c = jnp.zeros((B, H), jnp.float32)
    emb_seq = jnp.take(embed, captions, axis=0)
    outs = []
    for t in range(T):
        x = features.astype(bf16) if t == 0 else emb_seq[:, t, :]
        gates = (jnp.dot(x, W_ih, preferred_element_type=jnp.float32)
                 + jnp.dot(h.astype(bf16), W_hh, preferred_element_type=jnp.float32)
                 + b)
        i, f, g, o = jnp.split(gates, 4, axis=1)
        i, f, o = jax.nn.sigmoid(i), jax.nn.sigmoid(f), jax.nn.sigmoid(o)
        g = jnp.tanh(g)
        c = f * c + i * g
        h = o * jnp.tanh(c)
        outs.append(jnp.dot(h.astype(bf16), W_fc,
                            preferred_element_type=jnp.float32) + b_fc)
    return jnp.stack(outs, axis=1)


# ----------------------------- main -------------------------------------------


if __name__ == "__main__":
    embed_size, hidden_size, vocab_size = 32, 32, 128
    B, T = 4, 6

    key = jax.random.PRNGKey(0)
    k_param, k_feat, k_cap = jax.random.split(key, 3)

    params = init_params(k_param, embed_size, hidden_size, vocab_size)
    features = jax.random.normal(k_feat, (B, embed_size), jnp.float32)
    captions = jax.random.randint(k_cap, (B, T), 0, vocab_size, dtype=jnp.int32)

    out = decoder_rnn_forward(features, captions, params)
    out = jax.block_until_ready(out)

    ref = reference_forward(features, captions, params)
    assert out.shape == (B, T, vocab_size)
    assert jnp.allclose(out, ref, atol=5e-3, rtol=5e-3), "mismatch vs reference"

    print("KERNEL_OK")
</pallas_src>

<mosaic_0001>
module attributes {stable_mosaic.version = 11 : i64} {
  func.func @_gemm_bias_kernel(%arg0: i32, %arg1: i32, %arg2: memref<48x128xbf16, #tpu.memory_space<vmem>>, %arg3: memref<128x512xbf16, #tpu.memory_space<vmem>>, %arg4: memref<1x512xf32, #tpu.memory_space<vmem>>, %arg5: memref<48x512xf32, #tpu.memory_space<vmem>>) attributes {dimension_semantics = [#tpu.dimension_semantics<parallel>, #tpu.dimension_semantics<parallel>], iteration_bounds = array<i64: 1, 1>, scalar_prefetch = 0 : i64, scratch_operands = 0 : i64, tpu.core_type = #tpu.core_type<tc>, window_params = [{transform_indices = @transform_0, window_bounds = array<i64: 48, 128>}, {transform_indices = @transform_1, window_bounds = array<i64: 128, 512>}, {transform_indices = @transform_2, window_bounds = array<i64: 1, 512>}, {transform_indices = @transform_3, window_bounds = array<i64: 48, 512>}]} {
    %c0 = arith.constant 0 : index
    %c0_0 = arith.constant 0 : index
    %0 = vector.load %arg2[%c0, %c0_0] : memref<48x128xbf16, #tpu.memory_space<vmem>>, vector<48x128xbf16>
    %c0_1 = arith.constant 0 : index
    %c0_2 = arith.constant 0 : index
    %1 = vector.load %arg3[%c0_1, %c0_2] : memref<128x512xbf16, #tpu.memory_space<vmem>>, vector<128x512xbf16>
    %cst = arith.constant dense<0.000000e+00> : vector<48x512xf32>
    %2 = tpu.matmul %0, %1, %cst {dimension_numbers = #tpu.dot_dimension_numbers<[1], [0], [0], [1], [0, 0, 1, 1], [], []>} : vector<48x128xbf16>, vector<128x512xbf16>, vector<48x512xf32> -> vector<48x512xf32>
    %c0_3 = arith.constant 0 : index
    %c0_4 = arith.constant 0 : index
    %3 = vector.load %arg4[%c0_3, %c0_4] : memref<1x512xf32, #tpu.memory_space<vmem>>, vector<1x512xf32>
    %4 = vector.broadcast %3 : vector<1x512xf32> to vector<48x512xf32>
    %5 = arith.addf %2, %4 : vector<48x512xf32>
    %c0_5 = arith.constant 0 : index
    %c0_6 = arith.constant 0 : index
    %6 = vector.load %arg5[%c0_5, %c0_6] : memref<48x512xf32, #tpu.memory_space<vmem>>, vector<48x512xf32>
    tpu.vector_store %arg5[%c0_5, %c0_6], %5 {strides = array<i32>} : memref<48x512xf32, #tpu.memory_space<vmem>>, vector<48x512xf32>,
    return
  }
  func.func @transform_0(%arg0: i32, %arg1: i32) -> (i32, i32) {
    %c0_i32 = arith.constant 0 : i32
    %c0_i32_0 = arith.constant 0 : i32
    return %arg1, %c0_i32 : i32, i32
  }
  func.func @transform_1(%arg0: i32, %arg1: i32) -> (i32, i32) {
    %c0_i32 = arith.constant 0 : i32
    %c0_i32_0 = arith.constant 0 : i32
    return %c0_i32, %arg0 : i32, i32
  }
  func.func @transform_2(%arg0: i32, %arg1: i32) -> (i32, i32) {
    %c0_i32 = arith.constant 0 : i32
    %c0_i32_0 = arith.constant 0 : i32
    return %c0_i32, %arg0 : i32, i32
  }
  func.func @transform_3(%arg0: i32, %arg1: i32) -> (i32, i32) {
    %c0_i32 = arith.constant 0 : i32
    return %arg1, %arg0 : i32, i32
  }
}

</mosaic_0001>

<llo_original>
// kernel: tpu_custom_call.1
$region0: #{tpu_custom_call.1}
  #allocation0 [shape = 'u32[]', space=smem, size = 0x4, offset = 0x4, fixed_abs, tag = 'smem constant byte address 0x4 - core index']
  #allocation1 [shape = 'u32[72,128]{1,0:T(1,128)}', space=vmem, size = 0x9000, scoped, tag = 'internal scratch']
  %s0 = inlined_call_operand.hbm [shape: bf16[48,128], index: 0, kind: input, shape index: {}]
  %s1 = inlined_call_operand.hbm [shape: bf16[128,512], index: 1, kind: input, shape index: {}]
  %s2 = inlined_call_operand.hbm [shape: f32[1,512], index: 2, kind: input, shape index: {}]
  %s3 = inlined_call_operand.hbm [shape: f32[48,512], index: 3, kind: output, shape index: {}]
  %s4 = sld [smem:[#allocation0]]
  $region34: #{tpu_custom_call.1} parent=0
    _
  %s6 = ssub.s32 1, %s4
  %s7 = scalar_select 0, %s6, %s4
  $region1: #{tpu_custom_call.1} parent=0
    #allocation2 [shape = 'u8[12288]{0}', space=vmem, size = 0x3000, scoped, tag = 'input window, operand 0, single buffered']
    #allocation3 [shape = 's32[1]{0}', space=sflag, size = 0x4, scoped, tag = 'scoped memory for tpu_custom_call.1']
    #allocation4 [shape = 's32[1]{0}', space=sflag, size = 0x4, scoped, tag = 'scoped memory for tpu_custom_call.1']
    #allocation5 [shape = 'u8[131072]{0}', space=vmem, size = 0x20000, scoped, tag = 'input window, operand 1, single buffered']
    #allocation6 [shape = 's32[1]{0}', space=sflag, size = 0x4, scoped, tag = 'scoped memory for tpu_custom_call.1']
    #allocation7 [shape = 'u8[2048]{0}', space=vmem, size = 0x800, scoped, tag = 'input window, operand 2, single buffered']
    #allocation8 [shape = 'u8[98304]{0}', space=vmem, size = 0x18000, scoped, tag = 'output window, operand 0, single buffered']
    %8 = vsyncpa [#allocation3], 0
    %9 = vsyncpa [#allocation6], 0
    %10 = vsyncpa [#allocation4], 0
    // Predicated region
    $region2: #{tpu_custom_call.1} parent=1 // pred_check
      _
    $region3: #{tpu_custom_call.1} parent=1 // pred_check_branch
      %12 = sbr.rel (0) target = $region5
    $region4: #{tpu_custom_call.1} parent=1 // pred_region
      %14 = vsyncadd [#allocation3], 0
      %s15 = sshll.u32 %s0, 4
      %s16 = int_to_ptr.hbm [resolvable:$true] %s15
      %s17 = sshll.u32 [#allocation2], 4
      %s18 = int_to_ptr.vmem [resolvable:$true] %s17
      %23 = dma.hbm_to_vmem [thread:$0]  %s16, 384, %s18, [#allocation3], 64, 64, 4
    $region5: #{tpu_custom_call.1} parent=1 // pred_fallthru
      _
    // Predicated region
    $region6: #{tpu_custom_call.1} parent=1 // pred_check
      _
    $region7: #{tpu_custom_call.1} parent=1 // pred_check_branch
      %25 = sbr.rel (0) target = $region9
    $region8: #{tpu_custom_call.1} parent=1 // pred_region
      %27 = vsyncadd [#allocation6], 0
      %s28 = sshll.u32 %s1, 4
      %s29 = int_to_ptr.hbm [resolvable:$true] %s28
      %s30 = sshll.u32 [#allocation5], 4
      %s31 = int_to_ptr.vmem [resolvable:$true] %s30
      %36 = dma.hbm_to_vmem [thread:$0]  %s29, 4096, %s31, [#allocation6], 256, 256, 16
    $region9: #{tpu_custom_call.1} parent=1 // pred_fallthru
      _
    // Predicated region
    $region10: #{tpu_custom_call.1} parent=1 // pred_check
      _
    $region11: #{tpu_custom_call.1} parent=1 // pred_check_branch
      %38 = sbr.rel (0) target = $region13
    $region12: #{tpu_custom_call.1} parent=1 // pred_region
      %40 = vsyncadd [#allocation6], 0
      %s42 = sshll.u32 %s2, 4
      %s43 = int_to_ptr.hbm [resolvable:$true] %s42
      %s44 = sshll.u32 [#allocation7], 4
      %s45 = int_to_ptr.vmem [resolvable:$true] %s44
      %47 = dma.hbm_to_vmem [thread:$0]  %s43, 64, %s45, [#allocation6]
    $region13: #{tpu_custom_call.1} parent=1 // pred_fallthru
      _
    // Predicated region
    $region14: #{tpu_custom_call.1} parent=1 // pred_check
      _
    $region15: #{tpu_custom_call.1} parent=1 // pred_check_branch
      %49 = sbr.rel (0) target = $region17
    $region16: #{tpu_custom_call.1} parent=1 // pred_region
      %51 = dma.done [#allocation3], 384
    $region17: #{tpu_custom_call.1} parent=1 // pred_fallthru
      _
    // Predicated region
    $region18: #{tpu_custom_call.1} parent=1 // pred_check
      _
    $region19: #{tpu_custom_call.1} parent=1 // pred_check_branch
      %53 = sbr.rel (0) target = $region21
    $region20: #{tpu_custom_call.1} parent=1 // pred_region
      %55 = dma.done [#allocation6], 4096
    $region21: #{tpu_custom_call.1} parent=1 // pred_fallthru
      _
    // Predicated region
    $region22: #{tpu_custom_call.1} parent=1 // pred_check
      _
    $region23: #{tpu_custom_call.1} parent=1 // pred_check_branch
      %57 = sbr.rel (0) target = $region25
    $region24: #{tpu_custom_call.1} parent=1 // pred_region
      %59 = dma.done [#allocation6], 64
    $region25: #{tpu_custom_call.1} parent=1 // pred_fallthru
      _
    %v60 = vld [vmem:[#allocation2] sm:$0xf]
    %v61 = vld [vmem:[#allocation2 + $0x4] sm:$0xf]
    %v62 = vld [vmem:[#allocation2 + $0x8] sm:$0xf]
    %v63 = vld [vmem:[#allocation2 + $0xc] sm:$0xf]
    %v64 = vld [vmem:[#allocation2 + $0x10] sm:$0xf]
    %v65 = vld [vmem:[#allocation2 + $0x14] sm:$0xf]
    %v66 = vld [vmem:[#allocation5] sm:$0xff]
    %v67 = vld [vmem:[#allocation5 + $0x8] sm:$0xff]
    %v68 = vld [vmem:[#allocation5 + $0x10] sm:$0xff]
    %v69 = vld [vmem:[#allocation5 + $0x18] sm:$0xff]
    %v70 = vld [vmem:[#allocation5 + $0x20] sm:$0xff]
    %v71 = vld [vmem:[#allocation5 + $0x28] sm:$0xff]
    %v72 = vld [vmem:[#allocation5 + $0x30] sm:$0xff]
    %v73 = vld [vmem:[#allocation5 + $0x38] sm:$0xff]
    %v74 = vld [vmem:[#allocation5 + $0x40] sm:$0xff]
    %v75 = vld [vmem:[#allocation5 + $0x48] sm:$0xff]
    %v76 = vld [vmem:[#allocation5 + $0x50] sm:$0xff]
    %v77 = vld [vmem:[#allocation5 + $0x58] sm:$0xff]
    %v78 = vld [vmem:[#allocation5 + $0x60] sm:$0xff]
    %v79 = vld [vmem:[#allocation5 + $0x68] sm:$0xff]
    %v80 = vld [vmem:[#allocation5 + $0x70] sm:$0xff]
    %v81 = vld [vmem:[#allocation5 + $0x78] sm:$0xff]
    %v82 = vld [vmem:[#allocation5 + $0x80] sm:$0xff]
    %v83 = vld [vmem:[#allocation5 + $0x88] sm:$0xff]
    %v84 = vld [vmem:[#allocation5 + $0x90] sm:$0xff]
    %v85 = vld [vmem:[#allocation5 + $0x98] sm:$0xff]
    %v86 = vld [vmem:[#allocation5 + $0xa0] sm:$0xff]
    %v87 = vld [vmem:[#allocation5 + $0xa8] sm:$0xff]
    %v88 = vld [vmem:[#allocation5 + $0xb0] sm:$0xff]
    %v89 = vld [vmem:[#allocation5 + $0xb8] sm:$0xff]
    %v90 = vld [vmem:[#allocation5 + $0xc0] sm:$0xff]
    %v91 = vld [vmem:[#allocation5 + $0xc8] sm:$0xff]
    %v92 = vld [vmem:[#allocation5 + $0xd0] sm:$0xff]
    %v93 = vld [vmem:[#allocation5 + $0xd8] sm:$0xff]
    %v94 = vld [vmem:[#allocation5 + $0xe0] sm:$0xff]
    %v95 = vld [vmem:[#allocation5 + $0xe8] sm:$0xff]
    %v96 = vld [vmem:[#allocation5 + $0xf0] sm:$0xff]
    %v97 = vld [vmem:[#allocation5 + $0xf8] sm:$0xff]
    %v98 = vld [vmem:[#allocation7] sm:$0xf]
    %v100 = vperm.slane %v98, 0
    %v101 = vperm.slane %v98, 1
    %v102 = vperm.slane %v98, 2
    %v103 = vperm.slane %v98, 3
    %v114 = vunpack.c.l.b16 %v60
    %v115 = vunpack.c.l.b16 %v61
    %v116 = vunpack.c.l.b16 %v62
    %v117 = vunpack.c.l.b16 %v63
    %v118 = vunpack.c.l.b16 %v64
    %v119 = vunpack.c.l.b16 %v65
    %v120 = vpack.c.b16 %v115, %v114
    %v121 = vpack.c.b16 %v117, %v116
    %v122 = vpack.c.b16 %v119, %v118
    %v158 = vunpack.c.l.b16 %v66
    %v159 = vunpack.c.h.b16 %v66
    %v160 = vunpack.c.l.b16 %v67
    %v161 = vunpack.c.h.b16 %v67
    %v162 = vunpack.c.l.b16 %v68
    %v163 = vunpack.c.h.b16 %v68
    %v164 = vunpack.c.l.b16 %v69
    %v165 = vunpack.c.h.b16 %v69
    %v166 = vunpack.c.l.b16 %v70
    %v167 = vunpack.c.h.b16 %v70
    %v168 = vunpack.c.l.b16 %v71
    %v169 = vunpack.c.h.b16 %v71
    %v170 = vunpack.c.l.b16 %v72
    %v171 = vunpack.c.h.b16 %v72
    %v172 = vunpack.c.l.b16 %v73
    %v173 = vunpack.c.h.b16 %v73
    %v174 = vunpack.c.l.b16 %v74
    %v175 = vunpack.c.h.b16 %v74
    %v176 = vunpack.c.l.b16 %v75
    %v177 = vunpack.c.h.b16 %v75
    %v178 = vunpack.c.l.b16 %v76
    %v179 = vunpack.c.h.b16 %v76
    %v180 = vunpack.c.l.b16 %v77
    %v181 = vunpack.c.h.b16 %v77
    %v182 = vunpack.c.l.b16 %v78
    %v183 = vunpack.c.h.b16 %v78
    %v184 = vunpack.c.l.b16 %v79
    %v185 = vunpack.c.h.b16 %v79
    %v186 = vunpack.c.l.b16 %v80
    %v187 = vunpack.c.h.b16 %v80
    %v188 = vunpack.c.l.b16 %v81
    %v189 = vunpack.c.h.b16 %v81
    %v190 = vunpack.c.l.b16 %v82
    %v191 = vunpack.c.h.b16 %v82
    %v192 = vunpack.c.l.b16 %v83
    %v193 = vunpack.c.h.b16 %v83
    %v194 = vunpack.c.l.b16 %v84
    %v195 = vunpack.c.h.b16 %v84
    %v196 = vunpack.c.l.b16 %v85
    %v197 = vunpack.c.h.b16 %v85
    %v198 = vunpack.c.l.b16 %v86
    %v199 = vunpack.c.h.b16 %v86
    %v200 = vunpack.c.l.b16 %v87
    %v201 = vunpack.c.h.b16 %v87
    %v202 = vunpack.c.l.b16 %v88
    %v203 = vunpack.c.h.b16 %v88
    %v204 = vunpack.c.l.b16 %v89
    %v205 = vunpack.c.h.b16 %v89
    %v206 = vunpack.c.l.b16 %v90
    %v207 = vunpack.c.h.b16 %v90
    %v208 = vunpack.c.l.b16 %v91
    %v209 = vunpack.c.h.b16 %v91
    %v210 = vunpack.c.l.b16 %v92
    %v211 = vunpack.c.h.b16 %v92
    %v212 = vunpack.c.l.b16 %v93
    %v213 = vunpack.c.h.b16 %v93
    %v214 = vunpack.c.l.b16 %v94
    %v215 = vunpack.c.h.b16 %v94
    %v216 = vunpack.c.l.b16 %v95
    %v217 = vunpack.c.h.b16 %v95
    %v218 = vunpack.c.l.b16 %v96
    %v219 = vunpack.c.h.b16 %v96
    %v220 = vunpack.c.l.b16 %v97
    %v221 = vunpack.c.h.b16 %v97
    %v222 = vpack.c.b16 %v162, %v158
    %v223 = vpack.c.b16 %v163, %v159
    %v224 = vpack.c.b16 %v164, %v160
    %v225 = vpack.c.b16 %v165, %v161
    %v226 = vpack.c.b16 %v170, %v166
    %v227 = vpack.c.b16 %v171, %v167
    %v228 = vpack.c.b16 %v172, %v168
    %v229 = vpack.c.b16 %v173, %v169
    %v230 = vpack.c.b16 %v178, %v174
    %v231 = vpack.c.b16 %v179, %v175
    %v232 = vpack.c.b16 %v180, %v176
    %v233 = vpack.c.b16 %v181, %v177
    %v234 = vpack.c.b16 %v186, %v182
    %v235 = vpack.c.b16 %v187, %v183
    %v236 = vpack.c.b16 %v188, %v184
    %v237 = vpack.c.b16 %v189, %v185
    %v238 = vpack.c.b16 %v194, %v190
    %v239 = vpack.c.b16 %v195, %v191
    %v240 = vpack.c.b16 %v196, %v192
    %v241 = vpack.c.b16 %v197, %v193
    %v242 = vpack.c.b16 %v202, %v198
    %v243 = vpack.c.b16 %v203, %v199
    %v244 = vpack.c.b16 %v204, %v200
    %v245 = vpack.c.b16 %v205, %v201
    %v246 = vpack.c.b16 %v210, %v206
    %v247 = vpack.c.b16 %v211, %v207
    %v248 = vpack.c.b16 %v212, %v208
    %v249 = vpack.c.b16 %v213, %v209
    %v250 = vpack.c.b16 %v218, %v214
    %v251 = vpack.c.b16 %v219, %v215
    %v252 = vpack.c.b16 %v220, %v216
    %v253 = vpack.c.b16 %v221, %v217
    %286 = vmatpush.bf16.msra.mxu0 %v250
    %287 = vmatpush.bf16.msra.mxu0 %v246
    %288 = vmatpush.bf16.msra.mxu0 %v242
    %289 = vmatpush.bf16.msra.mxu0 %v238
    %290 = vmatpush.bf16.msra.mxu0 %v234
    %291 = vmatpush.bf16.msra.mxu0 %v230
    %292 = vmatpush.bf16.msra.mxu0 %v226
    %293 = vmatpush.bf16.msra.mxu0 %v222
    %294 = vmatmul.bf16.gmra.mxu0 %v120
    %v295 = vpop.f32.mrf.mxu0
    %v296 = vadd.f32 %v100, %v295
    %v297 = vpop.f32.mrf.mxu0
    %v298 = vadd.f32 %v100, %v297
    %299 = vmatmul.bf16.gmra.mxu0 %v121
    %v300 = vpop.f32.mrf.mxu0
    %v301 = vadd.f32 %v100, %v300
    %v302 = vpop.f32.mrf.mxu0
    %v303 = vadd.f32 %v100, %v302
    %304 = vmatmul.bf16.gmra.mxu0 %v122
    %v305 = vpop.f32.mrf.mxu0
    %v306 = vadd.f32 %v100, %v305
    %v307 = vpop.f32.mrf.mxu0
    %v308 = vadd.f32 %v100, %v307
    %309 = vdwg.mxu0
    %310 = vmatpush.bf16.msra.mxu0 %v251
    %311 = vmatpush.bf16.msra.mxu0 %v247
    %312 = vmatpush.bf16.msra.mxu0 %v243
    %313 = vmatpush.bf16.msra.mxu0 %v239
    %314 = vmatpush.bf16.msra.mxu0 %v235
    %315 = vmatpush.bf16.msra.mxu0 %v231
    %316 = vmatpush.bf16.msra.mxu0 %v227
    %317 = vmatpush.bf16.msra.mxu0 %v223
    %318 = vmatmul.bf16.gmra.mxu0 %v120
    %v319 = vpop.f32.mrf.mxu0
    %v320 = vadd.f32 %v101, %v319
    %v321 = vpop.f32.mrf.mxu0
    %v322 = vadd.f32 %v101, %v321
    %323 = vmatmul.bf16.gmra.mxu0 %v121
    %v324 = vpop.f32.mrf.mxu0
    %v325 = vadd.f32 %v101, %v324
    %v326 = vpop.f32.mrf.mxu0
    %v327 = vadd.f32 %v101, %v326
    %328 = vmatmul.bf16.gmra.mxu0 %v122
    %v329 = vpop.f32.mrf.mxu0
    %v330 = vadd.f32 %v101, %v329
    %v331 = vpop.f32.mrf.mxu0
    %v332 = vadd.f32 %v101, %v331
    %333 = vdwg.mxu0
    %334 = vmatpush.bf16.msra.mxu0 %v252
    %335 = vmatpush.bf16.msra.mxu0 %v248
    %336 = vmatpush.bf16.msra.mxu0 %v244
    %337 = vmatpush.bf16.msra.mxu0 %v240
    %338 = vmatpush.bf16.msra.mxu0 %v236
    %339 = vmatpush.bf16.msra.mxu0 %v232
    %340 = vmatpush.bf16.msra.mxu0 %v228
    %341 = vmatpush.bf16.msra.mxu0 %v224
    %342 = vmatmul.bf16.gmra.mxu0 %v120
    %v343 = vpop.f32.mrf.mxu0
    %v344 = vadd.f32 %v102, %v343
    %v345 = vpop.f32.mrf.mxu0
    %v346 = vadd.f32 %v102, %v345
    %347 = vmatmul.bf16.gmra.mxu0 %v121
    %v348 = vpop.f32.mrf.mxu0
    %v349 = vadd.f32 %v102, %v348
    %v350 = vpop.f32.mrf.mxu0
    %v351 = vadd.f32 %v102, %v350
    %352 = vmatmul.bf16.gmra.mxu0 %v122
    %v353 = vpop.f32.mrf.mxu0
    %v354 = vadd.f32 %v102, %v353
    %v355 = vpop.f32.mrf.mxu0
    %v356 = vadd.f32 %v102, %v355
    %357 = vdwg.mxu0
    %358 = vmatpush.bf16.msra.mxu0 %v253
    %359 = vmatpush.bf16.msra.mxu0 %v249
    %360 = vmatpush.bf16.msra.mxu0 %v245
    %361 = vmatpush.bf16.msra.mxu0 %v241
    %362 = vmatpush.bf16.msra.mxu0 %v237
    %363 = vmatpush.bf16.msra.mxu0 %v233
    %364 = vmatpush.bf16.msra.mxu0 %v229
    %365 = vmatpush.bf16.msra.mxu0 %v225
    %366 = vmatmul.bf16.gmra.mxu0 %v120
    %v367 = vpop.f32.mrf.mxu0
    %v368 = vadd.f32 %v103, %v367
    %v369 = vpop.f32.mrf.mxu0
    %v370 = vadd.f32 %v103, %v369
    %371 = vmatmul.bf16.gmra.mxu0 %v121
    %v372 = vpop.f32.mrf.mxu0
    %v373 = vadd.f32 %v103, %v372
    %v374 = vpop.f32.mrf.mxu0
    %v375 = vadd.f32 %v103, %v374
    %376 = vmatmul.bf16.gmra.mxu0 %v122
    %v377 = vpop.f32.mrf.mxu0
    %v378 = vadd.f32 %v103, %v377
    %v379 = vpop.f32.mrf.mxu0
    %v380 = vadd.f32 %v103, %v379
    %381 = vdwg.mxu0
    %382 = vst [vmem:[#allocation8] sm:$0xff] %v296
    %383 = vst [vmem:[#allocation8 + $0x8] sm:$0xff] %v320
    %384 = vst [vmem:[#allocation8 + $0x10] sm:$0xff] %v344
    %385 = vst [vmem:[#allocation8 + $0x18] sm:$0xff] %v368
    %386 = vst [vmem:[#allocation8 + $0x20] sm:$0xff] %v298
    %387 = vst [vmem:[#allocation8 + $0x28] sm:$0xff] %v322
    %388 = vst [vmem:[#allocation8 + $0x30] sm:$0xff] %v346
    %389 = vst [vmem:[#allocation8 + $0x38] sm:$0xff] %v370
    %390 = vst [vmem:[#allocation8 + $0x40] sm:$0xff] %v301
    %391 = vst [vmem:[#allocation8 + $0x48] sm:$0xff] %v325
    %392 = vst [vmem:[#allocation8 + $0x50] sm:$0xff] %v349
    %393 = vst [vmem:[#allocation8 + $0x58] sm:$0xff] %v373
    %394 = vst [vmem:[#allocation8 + $0x60] sm:$0xff] %v303
    %395 = vst [vmem:[#allocation8 + $0x68] sm:$0xff] %v327
    %396 = vst [vmem:[#allocation8 + $0x70] sm:$0xff] %v351
    %397 = vst [vmem:[#allocation8 + $0x78] sm:$0xff] %v375
    %398 = vst [vmem:[#allocation8 + $0x80] sm:$0xff] %v306
    %399 = vst [vmem:[#allocation8 + $0x88] sm:$0xff] %v330
    %400 = vst [vmem:[#allocation8 + $0x90] sm:$0xff] %v354
    %401 = vst [vmem:[#allocation8 + $0x98] sm:$0xff] %v378
    %402 = vst [vmem:[#allocation8 + $0xa0] sm:$0xff] %v308
    %403 = vst [vmem:[#allocation8 + $0xa8] sm:$0xff] %v332
    %404 = vst [vmem:[#allocation8 + $0xb0] sm:$0xff] %v356
    %405 = vst [vmem:[#allocation8 + $0xb8] sm:$0xff] %v380
    // Predicated region
    $region26: #{tpu_custom_call.1} parent=1 // pred_check
      _
    $region27: #{tpu_custom_call.1} parent=1 // pred_check_branch
      %407 = sbr.rel (0) target = $region29
    $region28: #{tpu_custom_call.1} parent=1 // pred_region
      %409 = vsyncadd [#allocation4], 0
      %s410 = sshll.u32 [#allocation8], 4
      %s411 = int_to_ptr.vmem [resolvable:$true] %s410
      %s412 = sshll.u32 %s3, 4
      %s413 = int_to_ptr.hbm [resolvable:$true] %s412
      %418 = dma.vmem_to_hbm [thread:$0]  %s411, 3072, %s413, [#allocation4], 512, 512, 32
    $region29: #{tpu_custom_call.1} parent=1 // pred_fallthru
      _
    // Predicated region
    $region30: #{tpu_custom_call.1} parent=1 // pred_check
      _
    $region31: #{tpu_custom_call.1} parent=1 // pred_check_branch
      %420 = sbr.rel (0) target = $region33
    $region32: #{tpu_custom_call.1} parent=1 // pred_region
      %422 = dma.done [#allocation4], 3072
    $region33: #{tpu_custom_call.1} parent=1 // pred_fallthru
      _
    %423 = vsyncpa [#allocation3], 1
    %424 = vsyncpa [#allocation6], 1
    %425 = vsyncpa [#allocation4], 1

</llo_original>
